<compile_context>
chip_gen: v6e
topology: v6e:2x2x1
jax: 0.10.0
libtpu: 0.0.40
codegen_flags: <defaults>
</compile_context>

<pallas_src>
import functools
import math

import numpy as np

import jax
import jax.numpy as jnp
from jax.experimental import pallas as pl
from jax.experimental.pallas import tpu as pltpu


def _time_emb_kernel(t_ref, wf_ref, phase_ref, out_ref, *, r):
    """Lane-packed sinusoidal time embedding.

    t_ref:     (tb, r)     f32 - r timesteps per packed output row.
    wf_ref:    (r, width)  f32 - block-diagonal frequency table.
    phase_ref: (1, width)  f32 - 0 for sin lanes, pi/2 for cos lanes, 0 for pad.
    out_ref:   (tb, width) f32 - width = r*dim; single lane-dense store.
    """
    t = t_ref[...]
    if r == 1:
        # Single multiply-add; no contraction needed.
        angle = t * wf_ref[...] + phase_ref[...]
    else:
        # Contraction on the MXU (vector-extended slot) instead of r VALU FMAs
        # + lane broadcasts.  HIGHEST precision keeps the f32 timesteps exact.
        angle = jnp.dot(
            t, wf_ref[...],
            precision=jax.lax.Precision.HIGHEST,
            preferred_element_type=jnp.float32,
        ) + phase_ref[...]
    # cos(x) == sin(x + pi/2); pad lanes have freq = 0, phase = 0 -> sin(0) = 0.
    out_ref[...] = jnp.sin(angle)


@functools.lru_cache(maxsize=None)
def _tables(dim):
    """Per-dim constants, built once in numpy (no per-call XLA table ops)."""
    if dim < 4:
        raise ValueError("dim must be >= 4 so that half_dim - 1 > 0")
    half = dim // 2

    # Packing factor: smallest r with (r*dim) % 128 == 0, capped at 16.
    r_full = 128 // math.gcd(dim, 128)
    r = min(r_full, 16)
    width = r * dim

    scale = math.log(10000.0) / (half - 1)
    freqs = np.exp(np.arange(half, dtype=np.float32) * np.float32(-scale))
    freqs = freqs.astype(np.float32)

    freq_dim = np.zeros((dim,), np.float32)
    freq_dim[:half] = freqs
    freq_dim[half:2 * half] = freqs
    phase_dim = np.zeros((dim,), np.float32)
    phase_dim[half:2 * half] = np.float32(math.pi / 2.0)

    wf = np.zeros((r, width), np.float32)
    for j in range(r):
        wf[j, j * dim:(j + 1) * dim] = freq_dim
    phase = np.tile(phase_dim, r)[None, :]

    # Materialize as device constants once per dim.
    return r, width, jnp.asarray(wf), jnp.asarray(phase)


def _pick_block_rows(rows, width, r):
    """Biggest row tile that fits a conservative VMEM budget (incl. temporaries),
    capped so v7x's two TensorCores both receive grid steps."""
    budget = 8 * 1024 * 1024
    # wf + phase (double-buffered, small) are fixed per block.
    fixed = 4 * (2 * r * width + 2 * 8 * width)
    # out tile x2 (double-buffered) + ~2 in-kernel (tb, width) f32 temporaries
    # + lane-padded t tile x2.
    per_row = 4 * (2 * width + 2 * width + 2 * 128)
    tb = max(8, min(1024, (budget - fixed) // per_row))
    tb = (tb // 8) * 8
    # v7x megacore: keep at least 2 grid steps when there is work to split.
    if rows >= 16:
        half_rows = (((rows + 1) // 2 + 7) // 8) * 8
        tb = min(tb, max(8, half_rows))
    # Don't exceed the (rounded-up) row count.
    tb = min(tb, ((rows + 7) // 8) * 8)
    return max(8, tb)


@functools.partial(jax.jit, static_argnums=(1,))
def sinusoidal_time_embedding(t, dim):
    """t: (B,) array (any real/int dtype). Returns (B, dim) float32 embedding
    matching SinusoidalTimeEmbedding.forward."""
    r, width, wf, phase = _tables(dim)
    B = int(t.shape[0])

    # Pack B timesteps into rows of r; only pad up to a multiple of r (tiny).
    rows = -(-B // r)
    b_pad = rows * r
    t_f32 = t.astype(jnp.float32)
    if b_pad != B:
        t_f32 = jnp.pad(t_f32, (0, b_pad - B))
    t_packed = t_f32.reshape(rows, r)

    tb = _pick_block_rows(rows, width, r)
    grid = (pl.cdiv(rows, tb),)  # ragged last block is masked by Pallas

    est_vmem = 4 * (4 * tb * width + 2 * tb * 128 + 2 * r * width + 16 * width)
    vmem_limit = int(min(max(2 * est_vmem, 16 * 2**20), 32 * 2**20))

    kernel = functools.partial(_time_emb_kernel, r=r)

    out_packed = pl.pallas_call(
        kernel,
        out_shape=jax.ShapeDtypeStruct((rows, width), jnp.float32),
        grid=grid,
        in_specs=[
            pl.BlockSpec((tb, r), lambda i: (i, 0)),
            pl.BlockSpec((r, width), lambda i: (0, 0)),
            pl.BlockSpec((1, width), lambda i: (0, 0)),
        ],
        out_specs=pl.BlockSpec((tb, width), lambda i: (i, 0)),
        compiler_params=pltpu.CompilerParams(
            dimension_semantics=("parallel",),
            vmem_limit_bytes=vmem_limit,
        ),
        cost_estimate=pl.CostEstimate(
            flops=2 * rows * r * width,
            transcendentals=rows * width,
            bytes_accessed=4 * (rows * r + rows * width + r * width + width),
        ),
    )(t_packed, wf, phase)

    # Row-major (rows, r*dim) == (rows*r, dim) => free view.
    out = out_packed.reshape(b_pad, dim)
    if b_pad != B:
        out = out[:B]          # only when B % r != 0 (small tail copy)
    return out


def _reference(t, dim):
    half_dim = dim // 2
    scale = math.log(10000.0) / (half_dim - 1)
    freqs = jnp.exp(jnp.arange(half_dim, dtype=jnp.float32) * -scale)
    emb = t[:, None].astype(jnp.float32) * freqs[None, :]
    emb = jnp.concatenate([jnp.sin(emb), jnp.cos(emb)], axis=-1)
    if dim % 2 == 1:
        emb = jnp.concatenate([emb, jnp.zeros_like(emb[:, :1])], axis=-1)
    return emb


if __name__ == "__main__":
    key = jax.random.PRNGKey(0)
    B, dim = 8, 32

    # Deterministic timesteps in [0, 1000), cast like torch's t.float().
    t = jax.random.randint(key, (B,), minval=0, maxval=1000).astype(jnp.float32)

    out = jax.block_until_ready(sinusoidal_time_embedding(t, dim))
    ref = _reference(t, dim)
    assert out.shape == (B, dim), out.shape
    # f32 trig at arguments up to ~1e3: a 1-ulp argument perturbation already
    # moves sin/cos by ~6e-5, and cos is evaluated as sin(x + pi/2) in-kernel,
    # so compare with a tolerance appropriate for f32 (not 1e-5).
    assert jnp.allclose(out, ref, atol=2e-3, rtol=2e-3), \
        float(jnp.max(jnp.abs(out - ref)))

    # Odd-dim path exercises the zero-pad column and the B % r != 0 tail.
    dim_odd = 33
    out_odd = jax.block_until_ready(sinusoidal_time_embedding(t, dim_odd))
    ref_odd = _reference(t, dim_odd)
    assert out_odd.shape == (B, dim_odd), out_odd.shape
    assert jnp.allclose(out_odd, ref_odd, atol=2e-3, rtol=2e-3), \
        float(jnp.max(jnp.abs(out_odd - ref_odd)))

    print("KERNEL_OK")
</pallas_src>

<mosaic_0001>
module attributes {stable_mosaic.version = 11 : i64} {
  func.func @_time_emb_kernel(%arg0: i32, %arg1: memref<8x4xf32, #tpu.memory_space<vmem>>, %arg2: memref<4x128xf32, #tpu.memory_space<vmem>>, %arg3: memref<1x128xf32, #tpu.memory_space<vmem>>, %arg4: memref<8x128xf32, #tpu.memory_space<vmem>>) attributes {dimension_semantics = [#tpu.dimension_semantics<parallel>], iteration_bounds = array<i64: 1>, scalar_prefetch = 0 : i64, scratch_operands = 0 : i64, tpu.core_type = #tpu.core_type<tc>, window_params = [{transform_indices = @transform_0, window_bounds = array<i64: 8, 4>}, {pipeline_mode = #tpu.pipeline_mode<synchronous>, transform_indices = @transform_1, window_bounds = array<i64: 4, 128>}, {pipeline_mode = #tpu.pipeline_mode<synchronous>, transform_indices = @transform_2, window_bounds = array<i64: 1, 128>}, {transform_indices = @transform_3, window_bounds = array<i64: 8, 128>}]} {
    %c0 = arith.constant 0 : index
    %c0_0 = arith.constant 0 : index
    %0 = vector.load %arg1[%c0, %c0_0] : memref<8x4xf32, #tpu.memory_space<vmem>>, vector<8x4xf32>
    %c0_1 = arith.constant 0 : index
    %c0_2 = arith.constant 0 : index
    %1 = vector.load %arg2[%c0_1, %c0_2] : memref<4x128xf32, #tpu.memory_space<vmem>>, vector<4x128xf32>
    %cst = arith.constant dense<0.000000e+00> : vector<8x128xf32>
    %2 = tpu.matmul %0, %1, %cst {dimension_numbers = #tpu.dot_dimension_numbers<[1], [0], [0], [1], [0, 0, 1, 1], [], []>, precision = #tpu.contract_precision<fp32>} : vector<8x4xf32>, vector<4x128xf32>, vector<8x128xf32> -> vector<8x128xf32>
    %c0_3 = arith.constant 0 : index
    %c0_4 = arith.constant 0 : index
    %3 = vector.load %arg3[%c0_3, %c0_4] : memref<1x128xf32, #tpu.memory_space<vmem>>, vector<1x128xf32>
    %4 = vector.broadcast %3 : vector<1x128xf32> to vector<8x128xf32>
    %5 = arith.addf %2, %4 : vector<8x128xf32>
    %6 = math.sin %5 : vector<8x128xf32>
    %c0_5 = arith.constant 0 : index
    %c0_6 = arith.constant 0 : index
    %7 = vector.load %arg4[%c0_5, %c0_6] : memref<8x128xf32, #tpu.memory_space<vmem>>, vector<8x128xf32>
    tpu.vector_store %arg4[%c0_5, %c0_6], %6 {strides = array<i32>} : memref<8x128xf32, #tpu.memory_space<vmem>>, vector<8x128xf32>,
    return
  }
  func.func @transform_0(%arg0: i32) -> (i32, i32) {
    %c0_i32 = arith.constant 0 : i32
    %c0_i32_0 = arith.constant 0 : i32
    return %arg0, %c0_i32 : i32, i32
  }
  func.func @transform_1(%arg0: i32) -> (i32, i32) {
    %c0_i32 = arith.constant 0 : i32
    %c0_i32_0 = arith.constant 0 : i32
    %c0_i32_1 = arith.constant 0 : i32
    return %c0_i32, %c0_i32_0 : i32, i32
  }
  func.func @transform_2(%arg0: i32) -> (i32, i32) {
    %c0_i32 = arith.constant 0 : i32
    %c0_i32_0 = arith.constant 0 : i32
    %c0_i32_1 = arith.constant 0 : i32
    return %c0_i32, %c0_i32_0 : i32, i32
  }
  func.func @transform_3(%arg0: i32) -> (i32, i32) {
    %c0_i32 = arith.constant 0 : i32
    %c0_i32_0 = arith.constant 0 : i32
    return %arg0, %c0_i32 : i32, i32
  }
}

</mosaic_0001>

<llo_original>
// kernel: sinusoidal_time_embedding.1
$region0: #{sinusoidal_time_embedding.1}
  #allocation0 [shape = 'u32[]', space=smem, size = 0x4, offset = 0x4, fixed_abs, tag = 'smem constant byte address 0x4 - core index']
  #allocation1 [shape = 'u32[144,128]{1,0:T(1,128)}', space=vmem, size = 0x12000, scoped, tag = 'internal scratch']
  %s0 = inlined_call_operand.vmem [shape: f32[2,4], index: 0, kind: input, shape index: {}]
  %s1 = inlined_call_operand.vmem [shape: f32[4,128], index: 1, kind: input, shape index: {}]
  %s2 = inlined_call_operand.vmem [shape: f32[1,128], index: 2, kind: input, shape index: {}]
  %s3 = inlined_call_operand.vmem [shape: f32[2,128], index: 3, kind: output, shape index: {}]
  %s4 = sld [smem:[#allocation0]]
  $region52: #{sinusoidal_time_embedding.1} parent=0
    _
  %s6 = ssub.s32 1, %s4
  %s7 = scalar_select 0, %s6, %s4
  $region1: #{sinusoidal_time_embedding.1} parent=0
    #allocation2 [shape = 'u8[4096]{0}', space=vmem, size = 0x1000, scoped, tag = 'output window, operand 0, single buffered']
    // Predicated region
    $region2: #{sinusoidal_time_embedding.1} parent=1 // pred_check
      _
    $region3: #{sinusoidal_time_embedding.1} parent=1 // pred_check_branch
      %9 = sbr.rel (0) target = $region5
    $region4: #{sinusoidal_time_embedding.1} parent=1 // pred_region
      _
    $region5: #{sinusoidal_time_embedding.1} parent=1 // pred_fallthru
      _
    // Predicated region
    $region6: #{sinusoidal_time_embedding.1} parent=1 // pred_check
      _
    $region7: #{sinusoidal_time_embedding.1} parent=1 // pred_check_branch
      %11 = sbr.rel (0) target = $region9
    $region8: #{sinusoidal_time_embedding.1} parent=1 // pred_region
      _
    $region9: #{sinusoidal_time_embedding.1} parent=1 // pred_fallthru
      _
    // Predicated region
    $region10: #{sinusoidal_time_embedding.1} parent=1 // pred_check
      _
    $region11: #{sinusoidal_time_embedding.1} parent=1 // pred_check_branch
      %13 = sbr.rel (0) target = $region13
    $region12: #{sinusoidal_time_embedding.1} parent=1 // pred_region
      _
    $region13: #{sinusoidal_time_embedding.1} parent=1 // pred_fallthru
      _
    %v14 = vld [vmem:[%s0] sm:$0xff]
    %v15 = vld [vmem:[%s1] sm:$0xf]
    %v16 = vld [vmem:[%s2] sm:$0x1]
    %v18 = vlaneseq
    %v19 = vshrl.u32 %v18, 7
    %v20 = vsub.s32 0, %v19
    %v21 = vrot.slane %v16, %v20
    %vm23 = vcmask 31744
    %v25 = vsel %vm23, %v14, 0
    %vm27 = vcmask 1043456
    %v29 = vsel %vm27, %v15, 0
    %31 = vmatprep.subr.mxu0 0.0
    %32 = vmatpush1.msra.mxu0 0.0
    %33 = vmatprep.subr.mxu0 0.0
    %34 = vmatpush1.msra.mxu0 0.0
    %35 = vmatprep.subr.mxu0 0.0
    %36 = vmatpush1.msra.mxu0 0.0
    %37 = vmatprep.subr.mxu0 0.0
    %38 = vmatpush1.msra.mxu0 0.0
    %39 = vmatprep.subr.mxu0 0.0
    %40 = vmatpush1.msra.mxu0 0.0
    %41 = vmatprep.subr.mxu0 0.0
    %42 = vmatpush1.msra.mxu0 0.0
    %43 = vmatprep.subr.mxu0 0.0
    %44 = vmatpush1.msra.mxu0 0.0
    %45 = vmatprep.subr.mxu0 0.0
    %46 = vmatpush1.msra.mxu0 0.0
    %47 = vmatprep.subr.mxu0 0.0
    %48 = vmatpush1.msra.mxu0 0.0
    %49 = vmatprep.subr.mxu0 0.0
    %50 = vmatpush1.msra.mxu0 0.0
    %51 = vmatprep.subr.mxu0 0.0
    %52 = vmatpush1.msra.mxu0 0.0
    %53 = vmatprep.subr.mxu0 0.0
    %54 = vmatpush1.msra.mxu0 0.0
    %55 = vmatprep.subr.mxu0 0.0
    %56 = vmatpush1.msra.mxu0 0.0
    %57 = vmatprep.subr.mxu0 0.0
    %58 = vmatpush1.msra.mxu0 0.0
    %59 = vmatprep.subr.mxu0 0.0
    %60 = vmatpush1.msra.mxu0 0.0
    %61 = vmatprep.subr.mxu0 0.0
    %v62 = vand.u32 %v29, 4294901760
    %63 = vmatpush1.msra.mxu0 %v62
    %64 = vmatprep.subr.mxu0 0.0
    %65 = vmatpush2.msra.mxu0 0.0
    %66 = vmatprep.subr.mxu0 0.0
    %67 = vmatpush2.msra.mxu0 0.0
    %68 = vmatprep.subr.mxu0 0.0
    %69 = vmatpush2.msra.mxu0 0.0
    %70 = vmatprep.subr.mxu0 0.0
    %71 = vmatpush2.msra.mxu0 0.0
    %72 = vmatprep.subr.mxu0 0.0
    %73 = vmatpush2.msra.mxu0 0.0
    %74 = vmatprep.subr.mxu0 0.0
    %75 = vmatpush2.msra.mxu0 0.0
    %76 = vmatprep.subr.mxu0 0.0
    %77 = vmatpush2.msra.mxu0 0.0
    %78 = vmatprep.subr.mxu0 0.0
    %79 = vmatpush2.msra.mxu0 0.0
    %80 = vmatprep.subr.mxu0 0.0
    %81 = vmatpush2.msra.mxu0 0.0
    %82 = vmatprep.subr.mxu0 0.0
    %83 = vmatpush2.msra.mxu0 0.0
    %84 = vmatprep.subr.mxu0 0.0
    %85 = vmatpush2.msra.mxu0 0.0
    %86 = vmatprep.subr.mxu0 0.0
    %87 = vmatpush2.msra.mxu0 0.0
    %88 = vmatprep.subr.mxu0 0.0
    %89 = vmatpush2.msra.mxu0 0.0
    %90 = vmatprep.subr.mxu0 0.0
    %91 = vmatpush2.msra.mxu0 0.0
    %92 = vmatprep.subr.mxu0 0.0
    %93 = vmatpush2.msra.mxu0 0.0
    %94 = vmatprep.subr.mxu0 0.0
    %95 = vmatpush2.msra.mxu0 0.0
    %96 = vmatprep.mubr.f32.mxu0 0.0
    %v97 = vand.u32 %v25, 4294901760
    %v98 = vsub.f32 %v25, %v97
    %v99 = vand.u32 %v98, 4294901760
    %v100 = vsub.f32 %v98, %v99
    %v101 = vand.u32 %v100, 4294901760
    %102 = vmatmul.mubr.f32.gmra.mxu0 %v101
    %v103 = vpop.f32.mrf.mxu0
    %v104 = vadd.f32 %v21, %v103
    %v105 = vpop.f32.mrf.mxu0
    %106 = vdwg.mxu0
    %107 = vmatprep.subr.mxu0 0.0
    %108 = vmatpush1.msra.mxu0 0.0
    %109 = vmatprep.subr.mxu0 0.0
    %110 = vmatpush1.msra.mxu0 0.0
    %111 = vmatprep.subr.mxu0 0.0
    %112 = vmatpush1.msra.mxu0 0.0
    %113 = vmatprep.subr.mxu0 0.0
    %114 = vmatpush1.msra.mxu0 0.0
    %115 = vmatprep.subr.mxu0 0.0
    %116 = vmatpush1.msra.mxu0 0.0
    %117 = vmatprep.subr.mxu0 0.0
    %118 = vmatpush1.msra.mxu0 0.0
    %119 = vmatprep.subr.mxu0 0.0
    %120 = vmatpush1.msra.mxu0 0.0
    %121 = vmatprep.subr.mxu0 0.0
    %122 = vmatpush1.msra.mxu0 0.0
    %123 = vmatprep.subr.mxu0 0.0
    %124 = vmatpush1.msra.mxu0 0.0
    %125 = vmatprep.subr.mxu0 0.0
    %126 = vmatpush1.msra.mxu0 0.0
    %127 = vmatprep.subr.mxu0 0.0
    %128 = vmatpush1.msra.mxu0 0.0
    %129 = vmatprep.subr.mxu0 0.0
    %130 = vmatpush1.msra.mxu0 0.0
    %131 = vmatprep.subr.mxu0 0.0
    %132 = vmatpush1.msra.mxu0 0.0
    %133 = vmatprep.subr.mxu0 0.0
    %134 = vmatpush1.msra.mxu0 0.0
    %135 = vmatprep.subr.mxu0 0.0
    %136 = vmatpush1.msra.mxu0 0.0
    %137 = vmatprep.subr.mxu0 0.0
    %v138 = vand.u32 %v29, 4294901760
    %v139 = vsub.f32 %v29, %v138
    %v140 = vand.u32 %v139, 4294901760
    %v141 = vsub.f32 %v139, %v140
    %v142 = vand.u32 %v141, 4294901760
    %143 = vmatpush1.msra.mxu0 %v142
    %144 = vmatprep.subr.mxu0 0.0
    %145 = vmatpush2.msra.mxu0 0.0
    %146 = vmatprep.subr.mxu0 0.0
    %147 = vmatpush2.msra.mxu0 0.0
    %148 = vmatprep.subr.mxu0 0.0
    %149 = vmatpush2.msra.mxu0 0.0
    %150 = vmatprep.subr.mxu0 0.0
    %151 = vmatpush2.msra.mxu0 0.0
    %152 = vmatprep.subr.mxu0 0.0
    %153 = vmatpush2.msra.mxu0 0.0
    %154 = vmatprep.subr.mxu0 0.0
    %155 = vmatpush2.msra.mxu0 0.0
    %156 = vmatprep.subr.mxu0 0.0
    %157 = vmatpush2.msra.mxu0 0.0
    %158 = vmatprep.subr.mxu0 0.0
    %159 = vmatpush2.msra.mxu0 0.0
    %160 = vmatprep.subr.mxu0 0.0
    %161 = vmatpush2.msra.mxu0 0.0
    %162 = vmatprep.subr.mxu0 0.0
    %163 = vmatpush2.msra.mxu0 0.0
    %164 = vmatprep.subr.mxu0 0.0
    %165 = vmatpush2.msra.mxu0 0.0
    %166 = vmatprep.subr.mxu0 0.0
    %167 = vmatpush2.msra.mxu0 0.0
    %168 = vmatprep.subr.mxu0 0.0
    %169 = vmatpush2.msra.mxu0 0.0
    %170 = vmatprep.subr.mxu0 0.0
    %171 = vmatpush2.msra.mxu0 0.0
    %172 = vmatprep.subr.mxu0 0.0
    %173 = vmatpush2.msra.mxu0 0.0
    %174 = vmatprep.subr.mxu0 0.0
    %175 = vmatpush2.msra.mxu0 0.0
    %176 = vmatprep.mubr.f32.mxu0 0.0
    %v177 = vand.u32 %v25, 4294901760
    %178 = vmatmul.mubr.f32.gmra.mxu0 %v177
    %v179 = vpop.f32.mrf.mxu0
    %v180 = vadd.f32 %v104, %v179
    %v181 = vpop.f32.mrf.mxu0
    %182 = vdwg.mxu0
    %183 = vmatprep.subr.mxu0 0.0
    %184 = vmatpush1.msra.mxu0 0.0
    %185 = vmatprep.subr.mxu0 0.0
    %186 = vmatpush1.msra.mxu0 0.0
    %187 = vmatprep.subr.mxu0 0.0
    %188 = vmatpush1.msra.mxu0 0.0
    %189 = vmatprep.subr.mxu0 0.0
    %190 = vmatpush1.msra.mxu0 0.0
    %191 = vmatprep.subr.mxu0 0.0
    %192 = vmatpush1.msra.mxu0 0.0
    %193 = vmatprep.subr.mxu0 0.0
    %194 = vmatpush1.msra.mxu0 0.0
    %195 = vmatprep.subr.mxu0 0.0
    %196 = vmatpush1.msra.mxu0 0.0
    %197 = vmatprep.subr.mxu0 0.0
    %198 = vmatpush1.msra.mxu0 0.0
    %199 = vmatprep.subr.mxu0 0.0
    %200 = vmatpush1.msra.mxu0 0.0
    %201 = vmatprep.subr.mxu0 0.0
    %202 = vmatpush1.msra.mxu0 0.0
    %203 = vmatprep.subr.mxu0 0.0
    %204 = vmatpush1.msra.mxu0 0.0
    %205 = vmatprep.subr.mxu0 0.0
    %206 = vmatpush1.msra.mxu0 0.0
    %207 = vmatprep.subr.mxu0 0.0
    %208 = vmatpush1.msra.mxu0 0.0
    %209 = vmatprep.subr.mxu0 0.0
    %210 = vmatpush1.msra.mxu0 0.0
    %211 = vmatprep.subr.mxu0 0.0
    %212 = vmatpush1.msra.mxu0 0.0
    %213 = vmatprep.subr.mxu0 0.0
    %v214 = vand.u32 %v29, 4294901760
    %v215 = vsub.f32 %v29, %v214
    %216 = vmatpush1.msra.mxu0 %v215
    %217 = vmatprep.subr.mxu0 0.0
    %218 = vmatpush2.msra.mxu0 0.0
    %219 = vmatprep.subr.mxu0 0.0
    %220 = vmatpush2.msra.mxu0 0.0
    %221 = vmatprep.subr.mxu0 0.0
    %222 = vmatpush2.msra.mxu0 0.0
    %223 = vmatprep.subr.mxu0 0.0
    %224 = vmatpush2.msra.mxu0 0.0
    %225 = vmatprep.subr.mxu0 0.0
    %226 = vmatpush2.msra.mxu0 0.0
    %227 = vmatprep.subr.mxu0 0.0
    %228 = vmatpush2.msra.mxu0 0.0
    %229 = vmatprep.subr.mxu0 0.0
    %230 = vmatpush2.msra.mxu0 0.0
    %231 = vmatprep.subr.mxu0 0.0
    %232 = vmatpush2.msra.mxu0 0.0
    %233 = vmatprep.subr.mxu0 0.0
    %234 = vmatpush2.msra.mxu0 0.0
    %235 = vmatprep.subr.mxu0 0.0
    %236 = vmatpush2.msra.mxu0 0.0
    %237 = vmatprep.subr.mxu0 0.0
    %238 = vmatpush2.msra.mxu0 0.0
    %239 = vmatprep.subr.mxu0 0.0
    %240 = vmatpush2.msra.mxu0 0.0
    %241 = vmatprep.subr.mxu0 0.0
    %242 = vmatpush2.msra.mxu0 0.0
    %243 = vmatprep.subr.mxu0 0.0
    %244 = vmatpush2.msra.mxu0 0.0
    %245 = vmatprep.subr.mxu0 0.0
    %246 = vmatpush2.msra.mxu0 0.0
    %247 = vmatprep.subr.mxu0 0.0
    %248 = vmatpush2.msra.mxu0 0.0
    %249 = vmatprep.mubr.f32.mxu0 0.0
    %v250 = vand.u32 %v25, 4294901760
    %v251 = vsub.f32 %v25, %v250
    %252 = vmatmul.mubr.f32.gmra.mxu0 %v251
    %v253 = vpop.f32.mrf.mxu0
    %v254 = vadd.f32 %v180, %v253
    %v255 = vpop.f32.mrf.mxu0
    %256 = vdwg.mxu0
    %257 = vmatprep.subr.mxu0 0.0
    %258 = vmatpush1.msra.mxu0 0.0
    %259 = vmatprep.subr.mxu0 0.0
    %260 = vmatpush1.msra.mxu0 0.0
    %261 = vmatprep.subr.mxu0 0.0
    %262 = vmatpush1.msra.mxu0 0.0
    %263 = vmatprep.subr.mxu0 0.0
    %264 = vmatpush1.msra.mxu0 0.0
    %265 = vmatprep.subr.mxu0 0.0
    %266 = vmatpush1.msra.mxu0 0.0
    %267 = vmatprep.subr.mxu0 0.0
    %268 = vmatpush1.msra.mxu0 0.0
    %269 = vmatprep.subr.mxu0 0.0
    %270 = vmatpush1.msra.mxu0 0.0
    %271 = vmatprep.subr.mxu0 0.0
    %272 = vmatpush1.msra.mxu0 0.0
    %273 = vmatprep.subr.mxu0 0.0
    %274 = vmatpush1.msra.mxu0 0.0
    %275 = vmatprep.subr.mxu0 0.0
    %276 = vmatpush1.msra.mxu0 0.0
    %277 = vmatprep.subr.mxu0 0.0
    %278 = vmatpush1.msra.mxu0 0.0
    %279 = vmatprep.subr.mxu0 0.0
    %280 = vmatpush1.msra.mxu0 0.0
    %281 = vmatprep.subr.mxu0 0.0
    %282 = vmatpush1.msra.mxu0 0.0
    %283 = vmatprep.subr.mxu0 0.0
    %284 = vmatpush1.msra.mxu0 0.0
    %285 = vmatprep.subr.mxu0 0.0
    %286 = vmatpush1.msra.mxu0 0.0
    %287 = vmatprep.subr.mxu0 0.0
    %v288 = vand.u32 %v29, 4294901760
    %289 = vmatpush1.msra.mxu0 %v288
    %290 = vmatprep.subr.mxu0 0.0
    %291 = vmatpush2.msra.mxu0 0.0
    %292 = vmatprep.subr.mxu0 0.0
    %293 = vmatpush2.msra.mxu0 0.0
    %294 = vmatprep.subr.mxu0 0.0
    %295 = vmatpush2.msra.mxu0 0.0
    %296 = vmatprep.subr.mxu0 0.0
    %297 = vmatpush2.msra.mxu0 0.0
    %298 = vmatprep.subr.mxu0 0.0
    %299 = vmatpush2.msra.mxu0 0.0
    %300 = vmatprep.subr.mxu0 0.0
    %301 = vmatpush2.msra.mxu0 0.0
    %302 = vmatprep.subr.mxu0 0.0
    %303 = vmatpush2.msra.mxu0 0.0
    %304 = vmatprep.subr.mxu0 0.0
    %305 = vmatpush2.msra.mxu0 0.0
    %306 = vmatprep.subr.mxu0 0.0
    %307 = vmatpush2.msra.mxu0 0.0
    %308 = vmatprep.subr.mxu0 0.0
    %309 = vmatpush2.msra.mxu0 0.0
    %310 = vmatprep.subr.mxu0 0.0
    %311 = vmatpush2.msra.mxu0 0.0
    %312 = vmatprep.subr.mxu0 0.0
    %313 = vmatpush2.msra.mxu0 0.0
    %314 = vmatprep.subr.mxu0 0.0
    %315 = vmatpush2.msra.mxu0 0.0
    %316 = vmatprep.subr.mxu0 0.0
    %317 = vmatpush2.msra.mxu0 0.0
    %318 = vmatprep.subr.mxu0 0.0
    %319 = vmatpush2.msra.mxu0 0.0
    %320 = vmatprep.subr.mxu0 0.0
    %321 = vmatpush2.msra.mxu0 0.0
    %322 = vmatprep.mubr.f32.mxu0 0.0
    %v323 = vand.u32 %v25, 4294901760
    %v324 = vsub.f32 %v25, %v323
    %v325 = vand.u32 %v324, 4294901760
    %326 = vmatmul.mubr.f32.gmra.mxu0 %v325
    %v327 = vpop.f32.mrf.mxu0
    %v328 = vadd.f32 %v254, %v327
    %v329 = vpop.f32.mrf.mxu0
    %330 = vdwg.mxu0
    %331 = vmatprep.subr.mxu0 0.0
    %332 = vmatpush1.msra.mxu0 0.0
    %333 = vmatprep.subr.mxu0 0.0
    %334 = vmatpush1.msra.mxu0 0.0
    %335 = vmatprep.subr.mxu0 0.0
    %336 = vmatpush1.msra.mxu0 0.0
    %337 = vmatprep.subr.mxu0 0.0
    %338 = vmatpush1.msra.mxu0 0.0
    %339 = vmatprep.subr.mxu0 0.0
    %340 = vmatpush1.msra.mxu0 0.0
    %341 = vmatprep.subr.mxu0 0.0
    %342 = vmatpush1.msra.mxu0 0.0
    %343 = vmatprep.subr.mxu0 0.0
    %344 = vmatpush1.msra.mxu0 0.0
    %345 = vmatprep.subr.mxu0 0.0
    %346 = vmatpush1.msra.mxu0 0.0
    %347 = vmatprep.subr.mxu0 0.0
    %348 = vmatpush1.msra.mxu0 0.0
    %349 = vmatprep.subr.mxu0 0.0
    %350 = vmatpush1.msra.mxu0 0.0
    %351 = vmatprep.subr.mxu0 0.0
    %352 = vmatpush1.msra.mxu0 0.0
    %353 = vmatprep.subr.mxu0 0.0
    %354 = vmatpush1.msra.mxu0 0.0
    %355 = vmatprep.subr.mxu0 0.0
    %356 = vmatpush1.msra.mxu0 0.0
    %357 = vmatprep.subr.mxu0 0.0
    %358 = vmatpush1.msra.mxu0 0.0
    %359 = vmatprep.subr.mxu0 0.0
    %360 = vmatpush1.msra.mxu0 0.0
    %361 = vmatprep.subr.mxu0 0.0
    %v362 = vand.u32 %v29, 4294901760
    %v363 = vsub.f32 %v29, %v362
    %v364 = vand.u32 %v363, 4294901760
    %365 = vmatpush1.msra.mxu0 %v364
    %366 = vmatprep.subr.mxu0 0.0
    %367 = vmatpush2.msra.mxu0 0.0
    %368 = vmatprep.subr.mxu0 0.0
    %369 = vmatpush2.msra.mxu0 0.0
    %370 = vmatprep.subr.mxu0 0.0
    %371 = vmatpush2.msra.mxu0 0.0
    %372 = vmatprep.subr.mxu0 0.0
    %373 = vmatpush2.msra.mxu0 0.0
    %374 = vmatprep.subr.mxu0 0.0
    %375 = vmatpush2.msra.mxu0 0.0
    %376 = vmatprep.subr.mxu0 0.0
    %377 = vmatpush2.msra.mxu0 0.0
    %378 = vmatprep.subr.mxu0 0.0
    %379 = vmatpush2.msra.mxu0 0.0
    %380 = vmatprep.subr.mxu0 0.0
    %381 = vmatpush2.msra.mxu0 0.0
    %382 = vmatprep.subr.mxu0 0.0
    %383 = vmatpush2.msra.mxu0 0.0
    %384 = vmatprep.subr.mxu0 0.0
    %385 = vmatpush2.msra.mxu0 0.0
    %386 = vmatprep.subr.mxu0 0.0
    %387 = vmatpush2.msra.mxu0 0.0
    %388 = vmatprep.subr.mxu0 0.0
    %389 = vmatpush2.msra.mxu0 0.0
    %390 = vmatprep.subr.mxu0 0.0
    %391 = vmatpush2.msra.mxu0 0.0
    %392 = vmatprep.subr.mxu0 0.0
    %393 = vmatpush2.msra.mxu0 0.0
    %394 = vmatprep.subr.mxu0 0.0
    %395 = vmatpush2.msra.mxu0 0.0
    %396 = vmatprep.subr.mxu0 0.0
    %397 = vmatpush2.msra.mxu0 0.0
    %398 = vmatprep.mubr.f32.mxu0 0.0
    %v399 = vand.u32 %v25, 4294901760
    %400 = vmatmul.mubr.f32.gmra.mxu0 %v399
    %v401 = vpop.f32.mrf.mxu0
    %v402 = vadd.f32 %v328, %v401
    %v403 = vpop.f32.mrf.mxu0
    %404 = vdwg.mxu0
    %405 = vmatprep.subr.mxu0 0.0
    %406 = vmatpush1.msra.mxu0 0.0
    %407 = vmatprep.subr.mxu0 0.0
    %408 = vmatpush1.msra.mxu0 0.0
    %409 = vmatprep.subr.mxu0 0.0
    %410 = vmatpush1.msra.mxu0 0.0
    %411 = vmatprep.subr.mxu0 0.0
    %412 = vmatpush1.msra.mxu0 0.0
    %413 = vmatprep.subr.mxu0 0.0
    %414 = vmatpush1.msra.mxu0 0.0
    %415 = vmatprep.subr.mxu0 0.0
    %416 = vmatpush1.msra.mxu0 0.0
    %417 = vmatprep.subr.mxu0 0.0
    %418 = vmatpush1.msra.mxu0 0.0
    %419 = vmatprep.subr.mxu0 0.0
    %420 = vmatpush1.msra.mxu0 0.0
    %421 = vmatprep.subr.mxu0 0.0
    %422 = vmatpush1.msra.mxu0 0.0
    %423 = vmatprep.subr.mxu0 0.0
    %424 = vmatpush1.msra.mxu0 0.0
    %425 = vmatprep.subr.mxu0 0.0
    %426 = vmatpush1.msra.mxu0 0.0
    %427 = vmatprep.subr.mxu0 0.0
    %428 = vmatpush1.msra.mxu0 0.0
    %429 = vmatprep.subr.mxu0 0.0
    %430 = vmatpush1.msra.mxu0 0.0
    %431 = vmatprep.subr.mxu0 0.0
    %432 = vmatpush1.msra.mxu0 0.0
    %433 = vmatprep.subr.mxu0 0.0
    %434 = vmatpush1.msra.mxu0 0.0
    %435 = vmatprep.subr.mxu0 0.0
    %v436 = vand.u32 %v29, 4294901760
    %437 = vmatpush1.msra.mxu0 %v436
    %438 = vmatprep.subr.mxu0 0.0
    %439 = vmatpush2.msra.mxu0 0.0
    %440 = vmatprep.subr.mxu0 0.0
    %441 = vmatpush2.msra.mxu0 0.0
    %442 = vmatprep.subr.mxu0 0.0
    %443 = vmatpush2.msra.mxu0 0.0
    %444 = vmatprep.subr.mxu0 0.0
    %445 = vmatpush2.msra.mxu0 0.0
    %446 = vmatprep.subr.mxu0 0.0
    %447 = vmatpush2.msra.mxu0 0.0
    %448 = vmatprep.subr.mxu0 0.0
    %449 = vmatpush2.msra.mxu0 0.0
    %450 = vmatprep.subr.mxu0 0.0
    %451 = vmatpush2.msra.mxu0 0.0
    %452 = vmatprep.subr.mxu0 0.0
    %453 = vmatpush2.msra.mxu0 0.0
    %454 = vmatprep.subr.mxu0 0.0
    %455 = vmatpush2.msra.mxu0 0.0
    %456 = vmatprep.subr.mxu0 0.0
    %457 = vmatpush2.msra.mxu0 0.0
    %458 = vmatprep.subr.mxu0 0.0
    %459 = vmatpush2.msra.mxu0 0.0
    %460 = vmatprep.subr.mxu0 0.0
    %461 = vmatpush2.msra.mxu0 0.0
    %462 = vmatprep.subr.mxu0 0.0
    %463 = vmatpush2.msra.mxu0 0.0
    %464 = vmatprep.subr.mxu0 0.0
    %465 = vmatpush2.msra.mxu0 0.0
    %466 = vmatprep.subr.mxu0 0.0
    %467 = vmatpush2.msra.mxu0 0.0
    %468 = vmatprep.subr.mxu0 0.0
    %469 = vmatpush2.msra.mxu0 0.0
    %470 = vmatprep.mubr.f32.mxu0 0.0
    %v471 = vand.u32 %v25, 4294901760
    %472 = vmatmul.mubr.f32.gmra.mxu0 %v471
    %v473 = vpop.f32.mrf.mxu0
    %v474 = vadd.f32 %v402, %v473
    %v475 = vpop.f32.mrf.mxu0
    %476 = vdwg.mxu0
    %v477 = vand.u32 2147483647, %v474
    %vm478 = vcmp.le.f32.partialorder %v477, 0.7853982
    %vm479 = vcmp.lt.s32.totalorder %v474, 0
    %v480 = vand.u32 %v474, 2139095040
    %v481 = vshrl.u32 %v480, 23
    %v482 = vsub.s32 %v481, 127
    %v483 = vand.u32 2147483647, %v474
    %v484 = vand.u32 %v483, 8388607
    %v485 = vor.u32 %v484, 8388608
    %v486 = vsub.s32 0, %v485
    %v487 = vadd.s32 %v482, 1
    %vm488 = vcmp.gt.s32.totalorder %v487, 0
    %v489 = vsel %vm488, %v487, 0
    %v490 = vshrl.u32 %v489, 5
    %v491 = vand.u32 %v489, 31
    %v492 = vsub.s32 32, %v491
    %v493 = vshrl.u32 683565275, %v492
    %v494 = vshll.u32 683565275, %v491
    %v495 = vshrl.u32 2475754826, %v492
    %v496 = vor.u32 %v494, %v495
    %v497 = vshll.u32 2475754826, %v491
    %v498 = vshrl.u32 2131351028, %v492
    %v499 = vor.u32 %v497, %v498
    %v500 = vshll.u32 2131351028, %v491
    %v501 = vshrl.u32 2102212464, %v492
    %v502 = vor.u32 %v500, %v501
    %v503 = vshll.u32 2102212464, %v491
    %v504 = vshrl.u32 920167782, %v492
    %v505 = vor.u32 %v503, %v504
    %v506 = vshll.u32 920167782, %v491
    %v507 = vshrl.u32 1326507024, %v492
    %v508 = vor.u32 %v506, %v507
    %vm509 = vcmp.lt.s32.totalorder %v490, 1
    %vm510 = vcmp.lt.s32.totalorder %v490, 2
    %vm511 = vcmp.lt.s32.totalorder %v490, 3
    %vm512 = vcmp.lt.s32.totalorder %v490, 4
    %v513 = vsel %vm509, %v493, %v496
    %v514 = vsel %vm512, %v502, 2102212464
    %v515 = vsel %vm511, %v499, %v514
    %v516 = vsel %vm510, %v513, %v515
    %v517 = vsel %vm509, %v496, %v499
    %v518 = vsel %vm512, %v505, 920167782
    %v519 = vsel %vm511, %v502, %v518
    %v520 = vsel %vm510, %v517, %v519
    %v521 = vsel %vm509, %v499, %v502
    %v522 = vsel %vm512, %v508, 1326507024
    %v523 = vsel %vm511, %v505, %v522
    %v524 = vsel %vm510, %v521, %v523
    %v525 = vshll.u32 %v485, 8
    %v526 = vmul.u32.u64.compose %v525, %v524
    %v527 = vextract.low.u32 %v526
    %v528 = vextract.high.u32 %v526
    %v529 = vmul.u32.u64.compose %v525, %v520
    %v530 = vextract.low.u32 %v529
    %v531 = vextract.high.u32 %v529
    %v532 = vmul.u32 %v525, %v516
    %v533 = vadd.s32 %v528, %v530
    %vm534 = vc.u32 %v528, %v530
    %v535 = vadd.s32 %v531, 1
    %v536 = vsel %vm534, %v535, %v531
    %v537 = vadd.s32 %v532, %v536
    %v538 = vadd.s32 %v537, 536870912
    %v539 = vshrl.u32 %v538, 30
    %v540 = vshll.u32 %v539, 30
    %v541 = vsub.s32 %v537, %v540
    %vm542 = vcmp.lt.s32.totalorder %v541, 0
    %v543 = vsub.s32 0, %v541
    %v544 = vsel %vm542, %v543, %v541
    %v545 = vclz %v544
    %v546 = vsub.s32 %v545, 2
    %vm547 = vcmp.gt.s32.totalorder 0, %v546
    %v548 = vsel %vm547, 0, %v546
    %v549 = vsub.s32 32, %v548
    %v550 = vshll.u32 %v541, %v548
    %v551 = vshrl.u32 %v533, %v549
    %v552 = vor.u32 %v550, %v551
    %v553 = vsub.s32 4294967266, %v548
    %v554 = vadd.s32 %v553, 127
    %v555 = vshll.u32 %v554, 23
    %v556 = vor.u32 4788187, %v555
    %v557 = vand.u32 2147483647, %v556
    %v559 = vcvt.s32.f32 %v552
    %v560 = vmul.f32 %v559, %v557
    %v561 = vxor.u32 %v560, 2147483648
    %v562 = vsel %vm479, %v561, %v560
    %v563 = vsub.s32 4, %v539
    %v564 = vsel %vm479, %v563, %v539
    %v565 = vsel %vm478, %v474, %v562
    %v566 = vsel %vm478, 0, %v564
    %v567 = vcosq.f32.pop %v565
    %v568 = vsinq.f32.pop %v565
    %vm569 = vweird.f32 %v474
    %v570 = vadd.s32 %v566, 3
    %v571 = vand.u32 %v570, 3
    %vm572 = vcmp.lt.s32.totalorder %v571, 2
    %vm573 = vcmp.eq.s32.totalorder %v571, 0
    %v574 = vxor.u32 %v568, 2147483648
    %v575 = vsel %vm573, %v567, %v574
    %vm576 = vcmp.eq.s32.totalorder %v571, 2
    %v577 = vxor.u32 %v567, 2147483648
    %v578 = vsel %vm576, %v577, %v568
    %v579 = vsel %vm572, %v575, %v578
    %v580 = vsel %vm569, nan, %v579
    %581 = vst [vmem:[#allocation2] sm:$0xff] %v580
    // Predicated region
    $region14: #{sinusoidal_time_embedding.1} parent=1 // pred_check
      _
    $region15: #{sinusoidal_time_embedding.1} parent=1 // pred_check_branch
      %583 = sbr.rel (0) target = $region17
    $region16: #{sinusoidal_time_embedding.1} parent=1 // pred_region
      // Predicated region
      $region18: #{sinusoidal_time_embedding.1} parent=16 // pred_check
        _
      $region19: #{sinusoidal_time_embedding.1} parent=16 // pred_check_branch
        %585 = sbr.rel (0) target = $region21
      $region20: #{sinusoidal_time_embedding.1} parent=16 // pred_region
        // Predicated region
        $region22: #{sinusoidal_time_embedding.1} parent=20 // pred_check
          _
        $region23: #{sinusoidal_time_embedding.1} parent=20 // pred_check_branch
          %587 = sbr.rel target = $region25
        $region24: #{sinusoidal_time_embedding.1} parent=20 // pred_region
          // Predicated region
          $region37: #{sinusoidal_time_embedding.1} parent=24 // pred_check
            _
          $region38: #{sinusoidal_time_embedding.1} parent=24 // pred_check_branch
            %603 = sbr.rel (0) target = $region40
          $region39: #{sinusoidal_time_embedding.1} parent=24 // pred_region
            %s605 = ssub.s32 4, 1
            loop: start=0, step=1, limit=1
            $region41: #{sinusoidal_time_embedding.1} parent=39 // loop_pre_header
              _
            $region42: #{sinusoidal_time_embedding.1} parent=39 // loop_header
              %s607 = sphi 0, %s611
              %p608 = scmp.ge.s32.totalorder %s607, 1
              %s612 = sphi [#allocation2], [#allocation2]
              %s613 = sphi %s3, %s3
            $region43: #{sinusoidal_time_embedding.1} parent=39 // loop_header_branch
              %610 = sbr.rel (%p608) target = $region47
            $region44: #{sinusoidal_time_embedding.1} parent=39 // loop_body
              %v614 = vld [vmem:[%s612] sm:%s605]
              %615 = vst [vmem:[%s613] sm:%s605] %v614
            $region45: #{sinusoidal_time_embedding.1} parent=39 // loop_footer
              %s611 = sadd.s32 1, %s607
            $region46: #{sinusoidal_time_embedding.1} parent=39 // loop_footer_branch
              %606 = sbr.rel target = $region42
            $region47: #{sinusoidal_time_embedding.1} parent=39 // loop_exit
              _
          $region40: #{sinusoidal_time_embedding.1} parent=24 // pred_fallthru
            _
        $region25: #{sinusoidal_time_embedding.1} parent=20 // pred_fallthru
          _
        // Predicated region
        $region26: #{sinusoidal_time_embedding.1} parent=20 // pred_check
          _
        $region27: #{sinusoidal_time_embedding.1} parent=20 // pred_check_branch
          %589 = sbr.rel (0) target = $region29
        $region28: #{sinusoidal_time_embedding.1} parent=20 // pred_region
          %s591 = ssub.s32 4, 1
          loop: start=0, step=1, limit=1
          $region30: #{sinusoidal_time_embedding.1} parent=28 // loop_pre_header
            _
          $region31: #{sinusoidal_time_embedding.1} parent=28 // loop_header
            %s593 = sphi 0, %s597
            %p594 = scmp.ge.s32.totalorder %s593, 1
            %s598 = sphi [#allocation2], [#allocation2]
            %s599 = sphi %s3, %s3
          $region32: #{sinusoidal_time_embedding.1} parent=28 // loop_header_branch
            %596 = sbr.rel (%p594) target = $region36
          $region33: #{sinusoidal_time_embedding.1} parent=28 // loop_body
            %v600 = vld [vmem:[%s598] sm:%s591]
            %601 = vst [vmem:[%s599] sm:%s591] %v600
          $region34: #{sinusoidal_time_embedding.1} parent=28 // loop_footer
            %s597 = sadd.s32 1, %s593
          $region35: #{sinusoidal_time_embedding.1} parent=28 // loop_footer_branch
            %592 = sbr.rel target = $region31
          $region36: #{sinusoidal_time_embedding.1} parent=28 // loop_exit
            _
        $region29: #{sinusoidal_time_embedding.1} parent=20 // pred_fallthru
          _
      $region21: #{sinusoidal_time_embedding.1} parent=16 // pred_fallthru
        _
      %616 = vnop
    $region17: #{sinusoidal_time_embedding.1} parent=1 // pred_fallthru
      _
    // Predicated region
    $region48: #{sinusoidal_time_embedding.1} parent=1 // pred_check
      _
    $region49: #{sinusoidal_time_embedding.1} parent=1 // pred_check_branch
      %618 = sbr.rel (0) target = $region51
    $region50: #{sinusoidal_time_embedding.1} parent=1 // pred_region
      _
    $region51: #{sinusoidal_time_embedding.1} parent=1 // pred_fallthru
      _

</llo_original>
